<compile_context>
chip_gen: v7x
topology: tpu7x:2x2x1
jax: 0.10.0
libtpu: 0.0.40
codegen_flags: <defaults>
</compile_context>

<pallas_src>
from functools import partial

import jax
import jax.numpy as jnp
import numpy as np
from jax.experimental import pallas as pl
from jax.experimental.pallas import tpu as pltpu


# ----------------------------------------------------------------------------
# Pass 1: gate/scale-folded input projections   x -> (qp, kp, vp)   (bf16)
# ----------------------------------------------------------------------------
def _proj_kernel(x_ref, wq_ref, bq_ref, wk_ref, wv_ref, bv_ref,
                 qp_ref, kp_ref, vp_ref):
    x = x_ref[0].astype(jnp.bfloat16)                       # bf16 MXU operand
    qp = jnp.dot(x, wq_ref[...], preferred_element_type=jnp.float32) + bq_ref[...]
    kp = jnp.dot(x, wk_ref[...], preferred_element_type=jnp.float32)
    vp = jnp.dot(x, wv_ref[...], preferred_element_type=jnp.float32) + bv_ref[...]
    qp_ref[0] = qp.astype(qp_ref.dtype)
    kp_ref[0] = kp.astype(kp_ref.dtype)
    vp_ref[0] = vp.astype(vp_ref.dtype)


# ----------------------------------------------------------------------------
# Pass 2: per-(batch, query-tile) attention + output projection
# ----------------------------------------------------------------------------
def _attn_kernel(n_head, head_dim, head_group, return_weights,
                 qp_ref, kp_ref, vp_ref, wo_ref, bo_ref,
                 out_ref, *rest):
    if return_weights:
        w_ref, wv_ref = rest
    else:
        (wv_ref,) = rest

    dh = head_dim
    two = 2 * dh
    n_groups = n_head // head_group

    for g in range(n_groups):
        # Lane-dense V slab covering `head_group` heads (128-aligned when
        # head_group*dh is a multiple of 128, e.g. dh=64 heads processed in pairs).
        v_slab = vp_ref[0, :, dh * head_group * g: dh * head_group * (g + 1)]
        wv_parts = []
        for hh in range(head_group):
            h = g * head_group + hh
            # [q_h | q_cs_h] columns already carry (1-gate_h)*scale^2 / gate_h*scale^2,
            # so ONE bf16 matmul over the 2*dh contraction yields the combined logits.
            qc = qp_ref[0, :, two * h: two * (h + 1)]        # (Tq, 2dh) bf16
            kc = kp_ref[0, :, two * h: two * (h + 1)]        # (T,  2dh) bf16
            logits = jnp.einsum("qd,kd->qk", qc, kc,
                                preferred_element_type=jnp.float32)  # (Tq, T) f32

            # f32 softmax over keys; divide goes to the EUP slot.
            m = jnp.max(logits, axis=-1, keepdims=True)
            e = jnp.exp(logits - m)
            w = e * pl.reciprocal(jnp.sum(e, axis=-1, keepdims=True), approx=True)

            if return_weights:
                w_ref[0, h] = w.astype(w_ref.dtype)

            # bf16 PV matmul, no re-upcast of w.
            vh = v_slab[:, dh * hh: dh * (hh + 1)]           # (T, dh) bf16
            wv_parts.append(jnp.dot(w.astype(jnp.bfloat16), vh,
                                    preferred_element_type=jnp.float32))
        # One lane-contiguous (128-aligned) store per head group.
        wv_ref[:, dh * head_group * g: dh * head_group * (g + 1)] = (
            jnp.concatenate(wv_parts, axis=-1).astype(wv_ref.dtype))

    out = jnp.dot(wv_ref[...], wo_ref[...],
                  preferred_element_type=jnp.float32) + bo_ref[...]
    out_ref[0] = out.astype(out_ref.dtype)


# ----------------------------------------------------------------------------
# Host-side packing: interleave per head, fold sigmoid(gate)*scale^2, cast bf16.
# ----------------------------------------------------------------------------
def _pack_params(params, n_head, n_state):
    D, H = n_state, n_head
    dh = D // H

    def interleave(a, b):            # (R, D), (R, D) -> (R, 2D): per head [a_h | b_h]
        rows = a.shape[0]
        a_r = a.reshape(rows, H, dh)
        b_r = b.reshape(rows, H, dh)
        return jnp.stack([a_r, b_r], axis=2).reshape(rows, 2 * D)

    # comb = (1-g)*scale^2 * q@k^T + g*scale^2 * q_cs@k_cs^T
    # -> fold the whole coefficient into the q-side weights AND bias.
    scale2 = float(dh) ** (-0.5)
    gate = jax.nn.sigmoid(params["gate"].astype(jnp.float32))            # (H,)
    coef = jnp.stack([(1.0 - gate) * scale2, gate * scale2], axis=1)     # (H, 2)
    coef = jnp.broadcast_to(coef[:, :, None], (H, 2, dh)).reshape(1, 2 * D)

    w_q = (interleave(params["wq"], params["wqcs"]) * coef).astype(jnp.bfloat16)
    b_q = (interleave(params["bq"], params["bqcs"]) * coef).astype(jnp.float32)
    w_k = interleave(params["wk"], params["wkcs"]).astype(jnp.bfloat16)  # key has no bias
    w_v = params["wv"].astype(jnp.bfloat16)
    b_v = params["bv"].astype(jnp.float32)
    w_o = params["wo"].astype(jnp.bfloat16)
    b_o = params["bo"].astype(jnp.float32)
    return w_q, b_q, w_k, w_v, b_v, w_o, b_o


def _pick_tile(n, max_tile):
    if n <= max_tile:
        return n
    for t in range(max_tile - max_tile % 8, 7, -8):
        if n % t == 0:
            return t
    return n


def _pick_head_group(n_head, dh):
    g = max(1, min(n_head, 128 // max(dh, 1)))
    while g > 1 and n_head % g:
        g -= 1
    return g


def mha_pe_forward(x, params, n_head, *, return_weights=True,
                   q_tile=256, proj_tile=256):
    B, T, D = x.shape
    assert D % n_head == 0
    dh = D // n_head

    w_q, b_q, w_k, w_v, b_v, w_o, b_o = _pack_params(params, n_head, D)

    tp = _pick_tile(T, proj_tile)
    tq = _pick_tile(T, q_tile)
    head_group = _pick_head_group(n_head, dh)

    # TODO(synk): raise vmem_limit_bytes (and single-buffer the weight specs with
    # pl.Buffered(1)) when running production Whisper shapes; 32 MiB is the safe
    # default-compatible budget across v5e/v6e/v7x for these small tiles.
    cparams = pltpu.CompilerParams(
        dimension_semantics=("parallel", "parallel"),
        vmem_limit_bytes=32 * 1024 * 1024,
    )

    def const(shape):
        return pl.BlockSpec(shape, lambda b, t, _n=len(shape): (0,) * _n)

    # ------------------------- Pass 1: projections -------------------------
    proj_cost = pl.CostEstimate(
        flops=2 * B * T * D * 5 * D,
        transcendentals=0,
        bytes_accessed=(B * T * D * x.dtype.itemsize          # x
                        + 5 * D * D * 2 + 3 * D * 4           # weights + biases
                        + B * T * 5 * D * 2),                 # bf16 outputs
    )
    qp, kp, vp = pl.pallas_call(
        _proj_kernel,
        out_shape=(jax.ShapeDtypeStruct((B, T, 2 * D), jnp.bfloat16),
                   jax.ShapeDtypeStruct((B, T, 2 * D), jnp.bfloat16),
                   jax.ShapeDtypeStruct((B, T, D), jnp.bfloat16)),
        grid=(B, T // tp),
        in_specs=[
            pl.BlockSpec((1, tp, D), lambda b, t: (b, t, 0)),   # x tile
            const((D, 2 * D)), const((1, 2 * D)),               # packed q weights/bias
            const((D, 2 * D)),                                  # packed k weights
            const((D, D)), const((1, D)),                       # v weights/bias
        ],
        out_specs=(
            pl.BlockSpec((1, tp, 2 * D), lambda b, t: (b, t, 0)),
            pl.BlockSpec((1, tp, 2 * D), lambda b, t: (b, t, 0)),
            pl.BlockSpec((1, tp, D), lambda b, t: (b, t, 0)),
        ),
        compiler_params=cparams,
        cost_estimate=proj_cost,
    )(x, w_q, b_q, w_k, w_v, b_v)

    # ---------------- Pass 2: attention + output projection ----------------
    w_bytes = B * n_head * T * T * x.dtype.itemsize if return_weights else 0
    attn_cost = pl.CostEstimate(
        flops=(B * n_head * (2 * T * T * 2 * dh + 2 * T * T * dh)
               + 2 * B * T * D * D),
        transcendentals=B * n_head * T * T,
        bytes_accessed=(B * T * 5 * D * 2                      # qp/kp/vp bf16
                        + D * D * 2 + D * 4                    # out proj weights/bias
                        + B * T * D * x.dtype.itemsize         # out
                        + w_bytes),
    )

    if return_weights:
        out_shape = (jax.ShapeDtypeStruct((B, T, D), x.dtype),
                     jax.ShapeDtypeStruct((B, n_head, T, T), x.dtype))
        out_specs = (pl.BlockSpec((1, tq, D), lambda b, t: (b, t, 0)),
                     pl.BlockSpec((1, n_head, tq, T), lambda b, t: (b, 0, t, 0)))
    else:
        out_shape = jax.ShapeDtypeStruct((B, T, D), x.dtype)
        out_specs = pl.BlockSpec((1, tq, D), lambda b, t: (b, t, 0))

    kernel = partial(_attn_kernel, n_head, dh, head_group, return_weights)
    res = pl.pallas_call(
        kernel,
        out_shape=out_shape,
        grid=(B, T // tq),
        in_specs=[
            pl.BlockSpec((1, tq, 2 * D), lambda b, t: (b, t, 0)),   # q tile
            pl.BlockSpec((1, T, 2 * D), lambda b, t: (b, 0, 0)),    # all keys (per batch)
            pl.BlockSpec((1, T, D), lambda b, t: (b, 0, 0)),        # all values (per batch)
            const((D, D)), const((1, D)),                           # out projection
        ],
        out_specs=out_specs,
        scratch_shapes=[pltpu.VMEM((tq, D), jnp.bfloat16)],         # wv accumulator
        compiler_params=cparams,
        cost_estimate=attn_cost,
    )(qp, kp, vp, w_o, b_o)

    return res


# ----------------------------------------------------------------------------
# Pure-JAX reference mirroring the PyTorch forward (mask=None, self-attention).
# ----------------------------------------------------------------------------
def mha_pe_reference(x, params, n_head):
    B, T, D = x.shape
    dh = D // n_head
    scale = dh ** (-0.25)

    q = x @ params["wq"] + params["bq"]
    q_cs = x @ params["wqcs"] + params["bqcs"]
    k = x @ params["wk"]
    k_cs = x @ params["wkcs"]
    v = x @ params["wv"] + params["bv"]

    def split(t):  # (B, T, D) -> (B, H, T, dh)
        return t.reshape(B, T, n_head, dh).transpose(0, 2, 1, 3)

    qh, kh, vh = split(q) * scale, split(k) * scale, split(v)
    qch, kch = split(q_cs) * scale, split(k_cs) * scale

    qk = jnp.einsum("bhqd,bhkd->bhqk", qh, kh)
    qk_cs = jnp.einsum("bhqd,bhkd->bhqk", qch, kch)

    g = jax.nn.sigmoid(params["gate"]).reshape(1, n_head, 1, 1)
    comb = (1.0 - g) * qk + g * qk_cs
    w = jax.nn.softmax(comb, axis=-1).astype(x.dtype)
    wv = jnp.einsum("bhqk,bhkd->bhqd", w, vh).transpose(0, 2, 1, 3).reshape(B, T, D)
    return wv @ params["wo"] + params["bo"], w


def init_params(key, n_state, n_head):
    ks = jax.random.split(key, 11)
    s = 0.05
    return {
        "wq":   jax.random.normal(ks[0], (n_state, n_state), jnp.float32) * s,
        "bq":   jax.random.normal(ks[1], (1, n_state), jnp.float32) * s,
        "wk":   jax.random.normal(ks[2], (n_state, n_state), jnp.float32) * s,
        "wv":   jax.random.normal(ks[3], (n_state, n_state), jnp.float32) * s,
        "bv":   jax.random.normal(ks[4], (1, n_state), jnp.float32) * s,
        "wqcs": jax.random.normal(ks[5], (n_state, n_state), jnp.float32) * s,
        "bqcs": jax.random.normal(ks[6], (1, n_state), jnp.float32) * s,
        "wkcs": jax.random.normal(ks[7], (n_state, n_state), jnp.float32) * s,
        "wo":   jax.random.normal(ks[8], (n_state, n_state), jnp.float32) * s,
        "bo":   jax.random.normal(ks[9], (1, n_state), jnp.float32) * s,
        # gate ~ U(0, 1) matching nn.init.uniform_; size 12 == n_head
        "gate": jax.random.uniform(ks[10], (n_head,), jnp.float32, 0.0, 1.0),
    }


if __name__ == "__main__":
    # The module hard-codes a gate of size 12 -> n_head must be 12.
    B, T, n_head = 2, 8, 12
    n_state = 96  # head_dim = 8

    key = jax.random.PRNGKey(0)
    kx, kparam = jax.random.split(key)
    x = jax.random.normal(kx, (B, T, n_state), jnp.float32)
    params = init_params(kparam, n_state, n_head)

    out, w = mha_pe_forward(x, params, n_head, return_weights=True)
    out = jax.block_until_ready(out)
    w = jax.block_until_ready(w)

    # Optional-weights path (skips the dominant (B,H,T,T) HBM writeback).
    out_only = jax.block_until_ready(
        mha_pe_forward(x, params, n_head, return_weights=False))

    ref_out, ref_w = mha_pe_reference(x, params, n_head)
    np.testing.assert_allclose(np.asarray(out), np.asarray(ref_out), rtol=3e-2, atol=3e-2)
    np.testing.assert_allclose(np.asarray(w), np.asarray(ref_w), rtol=3e-2, atol=3e-2)
    np.testing.assert_allclose(np.asarray(out_only), np.asarray(ref_out), rtol=3e-2, atol=3e-2)

    print("KERNEL_OK")
</pallas_src>

<mosaic_0001>
module attributes {stable_mosaic.version = 11 : i64} {
  func.func @_proj_kernel(%arg0: i32, %arg1: i32, %arg2: memref<1x8x96xf32, #tpu.memory_space<vmem>>, %arg3: memref<96x192xbf16, #tpu.memory_space<vmem>>, %arg4: memref<1x192xf32, #tpu.memory_space<vmem>>, %arg5: memref<96x192xbf16, #tpu.memory_space<vmem>>, %arg6: memref<96x96xbf16, #tpu.memory_space<vmem>>, %arg7: memref<1x96xf32, #tpu.memory_space<vmem>>, %arg8: memref<1x8x192xbf16, #tpu.memory_space<vmem>>, %arg9: memref<1x8x192xbf16, #tpu.memory_space<vmem>>, %arg10: memref<1x8x96xbf16, #tpu.memory_space<vmem>>) attributes {dimension_semantics = [#tpu.dimension_semantics<parallel>, #tpu.dimension_semantics<parallel>], iteration_bounds = array<i64: 2, 1>, scalar_prefetch = 0 : i64, scratch_operands = 0 : i64, tpu.core_type = #tpu.core_type<tc>, window_params = [{transform_indices = @transform_0, window_bounds = array<i64: 1, 8, 96>}, {pipeline_mode = #tpu.pipeline_mode<synchronous>, transform_indices = @transform_1, window_bounds = array<i64: 96, 192>}, {pipeline_mode = #tpu.pipeline_mode<synchronous>, transform_indices = @transform_2, window_bounds = array<i64: 1, 192>}, {pipeline_mode = #tpu.pipeline_mode<synchronous>, transform_indices = @transform_3, window_bounds = array<i64: 96, 192>}, {pipeline_mode = #tpu.pipeline_mode<synchronous>, transform_indices = @transform_4, window_bounds = array<i64: 96, 96>}, {pipeline_mode = #tpu.pipeline_mode<synchronous>, transform_indices = @transform_5, window_bounds = array<i64: 1, 96>}, {transform_indices = @transform_6, window_bounds = array<i64: 1, 8, 192>}, {transform_indices = @transform_7, window_bounds = array<i64: 1, 8, 192>}, {transform_indices = @transform_8, window_bounds = array<i64: 1, 8, 96>}]} {
    %c0 = arith.constant 0 : index
    %c0_0 = arith.constant 0 : index
    %c0_1 = arith.constant 0 : index
    %0 = vector.load %arg2[%c0, %c0_0, %c0_1] : memref<1x8x96xf32, #tpu.memory_space<vmem>>, vector<1x8x96xf32>
    %1 = vector.shape_cast %0 : vector<1x8x96xf32> to vector<8x96xf32>
    %2 = arith.truncf %1 : vector<8x96xf32> to vector<8x96xbf16>
    %c0_2 = arith.constant 0 : index
    %c0_3 = arith.constant 0 : index
    %3 = vector.load %arg3[%c0_2, %c0_3] : memref<96x192xbf16, #tpu.memory_space<vmem>>, vector<96x192xbf16>
    %cst = arith.constant dense<0.000000e+00> : vector<8x192xf32>
    %4 = tpu.matmul %2, %3, %cst {dimension_numbers = #tpu.dot_dimension_numbers<[1], [0], [0], [1], [0, 0, 1, 1], [], []>} : vector<8x96xbf16>, vector<96x192xbf16>, vector<8x192xf32> -> vector<8x192xf32>
    %c0_4 = arith.constant 0 : index
    %c0_5 = arith.constant 0 : index
    %5 = vector.load %arg4[%c0_4, %c0_5] : memref<1x192xf32, #tpu.memory_space<vmem>>, vector<1x192xf32>
    %6 = vector.broadcast %5 : vector<1x192xf32> to vector<8x192xf32>
    %7 = arith.addf %4, %6 : vector<8x192xf32>
    %c0_6 = arith.constant 0 : index
    %c0_7 = arith.constant 0 : index
    %8 = vector.load %arg5[%c0_6, %c0_7] : memref<96x192xbf16, #tpu.memory_space<vmem>>, vector<96x192xbf16>
    %cst_8 = arith.constant dense<0.000000e+00> : vector<8x192xf32>
    %9 = tpu.matmul %2, %8, %cst_8 {dimension_numbers = #tpu.dot_dimension_numbers<[1], [0], [0], [1], [0, 0, 1, 1], [], []>} : vector<8x96xbf16>, vector<96x192xbf16>, vector<8x192xf32> -> vector<8x192xf32>
    %c0_9 = arith.constant 0 : index
    %c0_10 = arith.constant 0 : index
    %10 = vector.load %arg6[%c0_9, %c0_10] : memref<96x96xbf16, #tpu.memory_space<vmem>>, vector<96x96xbf16>
    %cst_11 = arith.constant dense<0.000000e+00> : vector<8x96xf32>
    %11 = tpu.matmul %2, %10, %cst_11 {dimension_numbers = #tpu.dot_dimension_numbers<[1], [0], [0], [1], [0, 0, 1, 1], [], []>} : vector<8x96xbf16>, vector<96x96xbf16>, vector<8x96xf32> -> vector<8x96xf32>
    %c0_12 = arith.constant 0 : index
    %c0_13 = arith.constant 0 : index
    %12 = vector.load %arg7[%c0_12, %c0_13] : memref<1x96xf32, #tpu.memory_space<vmem>>, vector<1x96xf32>
    %13 = vector.broadcast %12 : vector<1x96xf32> to vector<8x96xf32>
    %14 = arith.addf %11, %13 : vector<8x96xf32>
    %15 = arith.truncf %7 : vector<8x192xf32> to vector<8x192xbf16>
    %c0_14 = arith.constant 0 : index
    %c0_15 = arith.constant 0 : index
    %c0_16 = arith.constant 0 : index
    %16 = vector.load %arg8[%c0_14, %c0_15, %c0_16] : memref<1x8x192xbf16, #tpu.memory_space<vmem>>, vector<1x8x192xbf16>
    %17 = vector.shape_cast %16 : vector<1x8x192xbf16> to vector<8x192xbf16>
    %18 = vector.shape_cast %15 : vector<8x192xbf16> to vector<1x8x192xbf16>
    tpu.vector_store %arg8[%c0_14, %c0_15, %c0_16], %18 {strides = array<i32>} : memref<1x8x192xbf16, #tpu.memory_space<vmem>>, vector<1x8x192xbf16>,
    %19 = arith.truncf %9 : vector<8x192xf32> to vector<8x192xbf16>
    %c0_17 = arith.constant 0 : index
    %c0_18 = arith.constant 0 : index
    %c0_19 = arith.constant 0 : index
    %20 = vector.load %arg9[%c0_17, %c0_18, %c0_19] : memref<1x8x192xbf16, #tpu.memory_space<vmem>>, vector<1x8x192xbf16>
    %21 = vector.shape_cast %20 : vector<1x8x192xbf16> to vector<8x192xbf16>
    %22 = vector.shape_cast %19 : vector<8x192xbf16> to vector<1x8x192xbf16>
    tpu.vector_store %arg9[%c0_17, %c0_18, %c0_19], %22 {strides = array<i32>} : memref<1x8x192xbf16, #tpu.memory_space<vmem>>, vector<1x8x192xbf16>,
    %23 = arith.truncf %14 : vector<8x96xf32> to vector<8x96xbf16>
    %c0_20 = arith.constant 0 : index
    %c0_21 = arith.constant 0 : index
    %c0_22 = arith.constant 0 : index
    %24 = vector.load %arg10[%c0_20, %c0_21, %c0_22] : memref<1x8x96xbf16, #tpu.memory_space<vmem>>, vector<1x8x96xbf16>
    %25 = vector.shape_cast %24 : vector<1x8x96xbf16> to vector<8x96xbf16>
    %26 = vector.shape_cast %23 : vector<8x96xbf16> to vector<1x8x96xbf16>
    tpu.vector_store %arg10[%c0_20, %c0_21, %c0_22], %26 {strides = array<i32>} : memref<1x8x96xbf16, #tpu.memory_space<vmem>>, vector<1x8x96xbf16>,
    return
  }
  func.func @transform_0(%arg0: i32, %arg1: i32) -> (i32, i32, i32) {
    %c0_i32 = arith.constant 0 : i32
    %c0_i32_0 = arith.constant 0 : i32
    return %arg0, %arg1, %c0_i32 : i32, i32, i32
  }
  func.func @transform_1(%arg0: i32, %arg1: i32) -> (i32, i32) {
    %c0_i32 = arith.constant 0 : i32
    %c0_i32_0 = arith.constant 0 : i32
    %c0_i32_1 = arith.constant 0 : i32
    return %c0_i32, %c0_i32_0 : i32, i32
  }
  func.func @transform_2(%arg0: i32, %arg1: i32) -> (i32, i32) {
    %c0_i32 = arith.constant 0 : i32
    %c0_i32_0 = arith.constant 0 : i32
    %c0_i32_1 = arith.constant 0 : i32
    return %c0_i32, %c0_i32_0 : i32, i32
  }
  func.func @transform_3(%arg0: i32, %arg1: i32) -> (i32, i32) {
    %c0_i32 = arith.constant 0 : i32
    %c0_i32_0 = arith.constant 0 : i32
    %c0_i32_1 = arith.constant 0 : i32
    return %c0_i32, %c0_i32_0 : i32, i32
  }
  func.func @transform_4(%arg0: i32, %arg1: i32) -> (i32, i32) {
    %c0_i32 = arith.constant 0 : i32
    %c0_i32_0 = arith.constant 0 : i32
    %c0_i32_1 = arith.constant 0 : i32
    return %c0_i32, %c0_i32_0 : i32, i32
  }
  func.func @transform_5(%arg0: i32, %arg1: i32) -> (i32, i32) {
    %c0_i32 = arith.constant 0 : i32
    %c0_i32_0 = arith.constant 0 : i32
    %c0_i32_1 = arith.constant 0 : i32
    return %c0_i32, %c0_i32_0 : i32, i32
  }
  func.func @transform_6(%arg0: i32, %arg1: i32) -> (i32, i32, i32) {
    %c0_i32 = arith.constant 0 : i32
    %c0_i32_0 = arith.constant 0 : i32
    return %arg0, %arg1, %c0_i32 : i32, i32, i32
  }
  func.func @transform_7(%arg0: i32, %arg1: i32) -> (i32, i32, i32) {
    %c0_i32 = arith.constant 0 : i32
    %c0_i32_0 = arith.constant 0 : i32
    return %arg0, %arg1, %c0_i32 : i32, i32, i32
  }
  func.func @transform_8(%arg0: i32, %arg1: i32) -> (i32, i32, i32) {
    %c0_i32 = arith.constant 0 : i32
    %c0_i32_0 = arith.constant 0 : i32
    return %arg0, %arg1, %c0_i32 : i32, i32, i32
  }
}

</mosaic_0001>

<llo_original>
// kernel: tpu_custom_call.1
$region0: #{tpu_custom_call.1}
  #allocation0 [shape = 'u32[]', space=smem, size = 0x4, offset = 0x4, fixed_abs, tag = 'smem constant byte address 0x4 - core index']
  #allocation1 [shape = 'u32[144,128]{1,0:T(1,128)}', space=vmem, size = 0x12000, scoped, tag = 'internal scratch']
  %s0 = inlined_call_operand.hbm [shape: f32[2,8,96], index: 0, kind: input, shape index: {}]
  %s1 = inlined_call_operand.hbm [shape: bf16[96,192], index: 1, kind: input, shape index: {}]
  %s2 = inlined_call_operand.vmem [shape: f32[1,192], index: 2, kind: input, shape index: {}]
  %s3 = inlined_call_operand.hbm [shape: bf16[96,192], index: 3, kind: input, shape index: {}]
  %s4 = inlined_call_operand.hbm [shape: bf16[96,96], index: 4, kind: input, shape index: {}]
  %s5 = inlined_call_operand.vmem [shape: f32[1,96], index: 5, kind: input, shape index: {}]
  %s6 = inlined_call_operand.hbm [shape: bf16[2,8,192], index: 6, kind: output, shape index: {0}]
  %s7 = inlined_call_operand.hbm [shape: bf16[2,8,192], index: 7, kind: output, shape index: {1}]
  %s8 = inlined_call_operand.hbm [shape: bf16[2,8,96], index: 8, kind: output, shape index: {2}]
  %9 = xla_tuple %s6, %s7, %s8
  %s10 = sld [smem:[#allocation0]]
  $region89: #{tpu_custom_call.1} parent=0
    _
  %s12 = ssub.s32 1, %s10
  %s13 = scalar_select 0, %s12, %s10
  $region1: #{tpu_custom_call.1} parent=0
    #allocation2 [shape = 'u8[8192]{0}', space=vmem, size = 0x2000, scoped, tag = 'input window, operand 0']
    #allocation3 [shape = 's32[2]{0}', space=sflag, size = 0x8, scoped, tag = 'scoped memory for tpu_custom_call.1']
    #allocation4 [shape = 's32[2]{0}', space=sflag, size = 0x8, scoped, tag = 'scoped memory for tpu_custom_call.1']
    #allocation5 [shape = 'u8[49152]{0}', space=vmem, size = 0xc000, scoped, tag = 'input window, operand 1, single buffered']
    #allocation6 [shape = 's32[1]{0}', space=sflag, size = 0x4, scoped, tag = 'scoped memory for tpu_custom_call.1']
    #allocation7 [shape = 'u8[49152]{0}', space=vmem, size = 0xc000, scoped, tag = 'input window, operand 3, single buffered']
    #allocation8 [shape = 'u8[24576]{0}', space=vmem, size = 0x6000, scoped, tag = 'input window, operand 4, single buffered']
    #allocation9 [shape = 's32[1]{0}', space=sflag, size = 0x4, scoped, tag = 'scoped memory for tpu_custom_call.1']
    #allocation10 [shape = 'u8[8192]{0}', space=vmem, size = 0x2000, scoped, tag = 'output window, operand 0']
    #allocation11 [shape = 'u8[8192]{0}', space=vmem, size = 0x2000, scoped, tag = 'output window, operand 1']
    #allocation12 [shape = 's32[2]{0}', space=sflag, size = 0x8, scoped, tag = 'scoped memory for tpu_custom_call.1']
    #allocation13 [shape = 'u8[4096]{0}', space=vmem, size = 0x1000, scoped, tag = 'output window, operand 2']
    %14 = vsyncpa [#allocation3], 0
    %s15 = scalar_lea.sflag [#allocation3], 1
    %16 = vsyncpa %s15, 0
    %17 = vsyncpa [#allocation6], 0
    %18 = vsyncpa [#allocation9], 0
    %19 = vsyncpa [#allocation4], 0
    %s20 = scalar_lea.sflag [#allocation4], 1
    %21 = vsyncpa %s20, 0
    %22 = vsyncpa [#allocation12], 0
    %s23 = scalar_lea.sflag [#allocation12], 1
    %24 = vsyncpa %s23, 0
    loop: start=0, step=1, limit=4
    $region2: #{tpu_custom_call.1} parent=1 // loop_pre_header
      _
    $region3: #{tpu_custom_call.1} parent=1 // loop_header
      %s26 = sphi 0, %s30
      %p27 = scmp.ge.s32.totalorder %s26, 4
      %s33 = sphi 0, %s45
      %s34 = sphi 0, %s41
      %s35 = sphi 0, %s33
      %s36 = sphi 0, %s34
      %s37 = sphi 0, %s35
      %s38 = sphi 0, %s36
      %s50 = sphi 0, %s52
      %s53 = sphi 0, %s50
      %s54 = sphi 0, %s53
      %s70 = sphi 0, %s54
      %s74 = sphi 0, %s74
      %s76 = sphi 0, %s74
      %s77 = sphi 0, %s76
      %s91 = sphi 0, %s77
      %s95 = sphi 0, %s95
      %s97 = sphi 0, %s95
      %s98 = sphi 0, %s97
      %s112 = sphi 0, %s98
      %s116 = sphi 0, %s116
      %s118 = sphi 0, %s116
      %s119 = sphi 0, %s118
      %s133 = sphi 0, %s119
      %s137 = sphi 0, %s137
      %s139 = sphi 0, %s137
      %s140 = sphi 0, %s139
      %s154 = sphi 0, %s140
      %s158 = sphi 0, %s158
      %s160 = sphi 0, %s158
      %s161 = sphi 0, %s160
      %s175 = sphi 0, %s161
      %s183 = sphi 0, %s185
      %s186 = sphi 0, %s183
      %s187 = sphi 0, %s186
      %s203 = sphi 0, %s187
      %s211 = sphi 0, %s213
      %s214 = sphi 0, %s211
      %s215 = sphi 0, %s214
      %s231 = sphi 0, %s215
      %s239 = sphi 0, %s241
      %s242 = sphi 0, %s239
      %s243 = sphi 0, %s242
      %s259 = sphi 0, %s243
    $region4: #{tpu_custom_call.1} parent=1 // loop_header_branch
      %29 = sbr.rel (%p27) target = $region8
    $region5: #{tpu_custom_call.1} parent=1 // loop_body
      %s31 = ssub.s32 %s26, 1
      %s32 = ssub.s32 %s26, 2
      %s39 = sadd.s32 1, %s34
      %p40 = scmp.ge.s32.totalorder %s39, 1
      %s41 = scalar_select %p40, 0, %s39
      %s42 = sadd.s32 1, %s33
      %s43 = scalar_select %p40, %s42, %s33
      %p44 = scmp.ge.s32.totalorder %s43, 2
      %s45 = scalar_select %p44, 0, %s43
      %s46 = ssub.s32 %s33, %s45
      %s47 = ssub.s32 %s34, %s41
      %s48 = sor.u32 %s46, %s47
      %p49 = scmp.eq.s32.totalorder %s48, 0
      %s51 = sadd.s32 %s50, 1
      %s52 = scalar_select %p49, %s50, %s51
      %p55 = pneg %p49
      %p56 = scmp.eq.s32.totalorder %s26, 1
      %p57 = por %p55, %p56
      %p58 = scmp.ne.s32.totalorder %s50, %s53
      %p59 = scmp.eq.s32.totalorder %s26, 0
      %p60 = por %p58, %p59
      %p61 = scmp.ne.s32.totalorder %s50, %s53
      %p62 = scmp.eq.s32.totalorder %s31, 1
      %p63 = por %p61, %p62
      %p64 = scmp.ne.s32.totalorder %s53, %s54
      %p65 = scmp.eq.s32.totalorder %s31, 0
      %p66 = por %p64, %p65
      %p67 = scmp.ne.s32.totalorder %s53, %s54
      %p68 = scmp.eq.s32.totalorder %s32, 1
      %p69 = por %p67, %p68
      %p71 = scmp.ne.s32.totalorder %s54, %s70
      %p72 = scmp.eq.s32.totalorder %s32, 0
      %p73 = por %p71, %p72
      %s75 = sadd.s32 %s74, 1
      %p78 = scmp.eq.s32.totalorder %s26, 1
      %p79 = scmp.ne.s32.totalorder %s74, %s76
      %p80 = scmp.eq.s32.totalorder %s26, 0
      %p81 = por %p79, %p80
      %p82 = scmp.ne.s32.totalorder %s74, %s76
      %p83 = scmp.eq.s32.totalorder %s31, 1
      %p84 = por %p82, %p83
      %p85 = scmp.ne.s32.totalorder %s76, %s77
      %p86 = scmp.eq.s32.totalorder %s31, 0
      %p87 = por %p85, %p86
      %p88 = scmp.ne.s32.totalorder %s76, %s77
      %p89 = scmp.eq.s32.totalorder %s32, 1
      %p90 = por %p88, %p89
      %p92 = scmp.ne.s32.totalorder %s77, %s91
      %p93 = scmp.eq.s32.totalorder %s32, 0
      %p94 = por %p92, %p93
      %s96 = sadd.s32 %s95, 1
      %p99 = scmp.eq.s32.totalorder %s26, 1
      %p100 = scmp.ne.s32.totalorder %s95, %s97
      %p101 = scmp.eq.s32.totalorder %s26, 0
      %p102 = por %p100, %p101
      %p103 = scmp.ne.s32.totalorder %s95, %s97
      %p104 = scmp.eq.s32.totalorder %s31, 1
      %p105 = por %p103, %p104
      %p106 = scmp.ne.s32.totalorder %s97, %s98
      %p107 = scmp.eq.s32.totalorder %s31, 0
      %p108 = por %p106, %p107
      %p109 = scmp.ne.s32.totalorder %s97, %s98
      %p110 = scmp.eq.s32.totalorder %s32, 1
      %p111 = por %p109, %p110
      %p113 = scmp.ne.s32.totalorder %s98, %s112
      %p114 = scmp.eq.s32.totalorder %s32, 0
      %p115 = por %p113, %p114
      %s117 = sadd.s32 %s116, 1
      %p120 = scmp.eq.s32.totalorder %s26, 1
      %p121 = scmp.ne.s32.totalorder %s116, %s118
      %p122 = scmp.eq.s32.totalorder %s26, 0
      %p123 = por %p121, %p122
      %p124 = scmp.ne.s32.totalorder %s116, %s118
      %p125 = scmp.eq.s32.totalorder %s31, 1
      %p126 = por %p124, %p125
      %p127 = scmp.ne.s32.totalorder %s118, %s119
      %p128 = scmp.eq.s32.totalorder %s31, 0
      %p129 = por %p127, %p128
      %p130 = scmp.ne.s32.totalorder %s118, %s119
      %p131 = scmp.eq.s32.totalorder %s32, 1
      %p132 = por %p130, %p131
      %p134 = scmp.ne.s32.totalorder %s119, %s133
      %p135 = scmp.eq.s32.totalorder %s32, 0
      %p136 = por %p134, %p135
      %s138 = sadd.s32 %s137, 1
      %p141 = scmp.eq.s32.totalorder %s26, 1
      %p142 = scmp.ne.s32.totalorder %s137, %s139
      %p143 = scmp.eq.s32.totalorder %s26, 0
      %p144 = por %p142, %p143
      %p145 = scmp.ne.s32.totalorder %s137, %s139
      %p146 = scmp.eq.s32.totalorder %s31, 1
      %p147 = por %p145, %p146
      %p148 = scmp.ne.s32.totalorder %s139, %s140
      %p149 = scmp.eq.s32.totalorder %s31, 0
      %p150 = por %p148, %p149
      %p151 = scmp.ne.s32.totalorder %s139, %s140
      %p152 = scmp.eq.s32.totalorder %s32, 1
      %p153 = por %p151, %p152
      %p155 = scmp.ne.s32.totalorder %s140, %s154
      %p156 = scmp.eq.s32.totalorder %s32, 0
      %p157 = por %p155, %p156
      %s159 = sadd.s32 %s158, 1
      %p162 = scmp.eq.s32.totalorder %s26, 1
      %p163 = scmp.ne.s32.totalorder %s158, %s160
      %p164 = scmp.eq.s32.totalorder %s26, 0
      %p165 = por %p163, %p164
      %p166 = scmp.ne.s32.totalorder %s158, %s160
      %p167 = scmp.eq.s32.totalorder %s31, 1
      %p168 = por %p166, %p167
      %p169 = scmp.ne.s32.totalorder %s160, %s161
      %p170 = scmp.eq.s32.totalorder %s31, 0
      %p171 = por %p169, %p170
      %p172 = scmp.ne.s32.totalorder %s160, %s161
      %p173 = scmp.eq.s32.totalorder %s32, 1
      %p174 = por %p172, %p173
      %p176 = scmp.ne.s32.totalorder %s161, %s175
      %p177 = scmp.eq.s32.totalorder %s32, 0
      %p178 = por %p176, %p177
      %s179 = ssub.s32 %s33, %s45
      %s180 = ssub.s32 %s34, %s41
      %s181 = sor.u32 %s179, %s180
      %p182 = scmp.eq.s32.totalorder %s181, 0
      %s184 = sadd.s32 %s183, 1
      %s185 = scalar_select %p182, %s183, %s184
      %p188 = pneg %p182
      %p189 = scmp.eq.s32.totalorder %s26, 1
      %p190 = por %p188, %p189
      %p191 = scmp.ne.s32.totalorder %s183, %s186
      %p192 = scmp.eq.s32.totalorder %s26, 0
      %p193 = por %p191, %p192
      %p194 = scmp.ne.s32.totalorder %s183, %s186
      %p195 = scmp.eq.s32.totalorder %s31, 1
      %p196 = por %p194, %p195
      %p197 = scmp.ne.s32.totalorder %s186, %s187
      %p198 = scmp.eq.s32.totalorder %s31, 0
      %p199 = por %p197, %p198
      %p200 = scmp.ne.s32.totalorder %s186, %s187
      %p201 = scmp.eq.s32.totalorder %s32, 1
      %p202 = por %p200, %p201
      %p204 = scmp.ne.s32.totalorder %s187, %s203
      %p205 = scmp.eq.s32.totalorder %s32, 0
      %p206 = por %p204, %p205
      %s207 = ssub.s32 %s33, %s45
      %s208 = ssub.s32 %s34, %s41
      %s209 = sor.u32 %s207, %s208
      %p210 = scmp.eq.s32.totalorder %s209, 0
      %s212 = sadd.s32 %s211, 1
      %s213 = scalar_select %p210, %s211, %s212
      %p216 = pneg %p210
      %p217 = scmp.eq.s32.totalorder %s26, 1
      %p218 = por %p216, %p217
      %p219 = scmp.ne.s32.totalorder %s211, %s214
      %p220 = scmp.eq.s32.totalorder %s26, 0
      %p221 = por %p219, %p220
      %p222 = scmp.ne.s32.totalorder %s211, %s214
      %p223 = scmp.eq.s32.totalorder %s31, 1
      %p224 = por %p222, %p223
      %p225 = scmp.ne.s32.totalorder %s214, %s215
      %p226 = scmp.eq.s32.totalorder %s31, 0
      %p227 = por %p225, %p226
      %p228 = scmp.ne.s32.totalorder %s214, %s215
      %p229 = scmp.eq.s32.totalorder %s32, 1
      %p230 = por %p228, %p229
      %p232 = scmp.ne.s32.totalorder %s215, %s231
      %p233 = scmp.eq.s32.totalorder %s32, 0
      %p234 = por %p232, %p233
      %s235 = ssub.s32 %s33, %s45
      %s236 = ssub.s32 %s34, %s41
      %s237 = sor.u32 %s235, %s236
      %p238 = scmp.eq.s32.totalorder %s237, 0
      %s240 = sadd.s32 %s239, 1
      %s241 = scalar_select %p238, %s239, %s240
      %p244 = pneg %p238
      %p245 = scmp.eq.s32.totalorder %s26, 1
      %p246 = por %p244, %p245
      %p247 = scmp.ne.s32.totalorder %s239, %s242
      %p248 = scmp.eq.s32.totalorder %s26, 0
      %p249 = por %p247, %p248
      %p250 = scmp.ne.s32.totalorder %s239, %s242
      %p251 = scmp.eq.s32.totalorder %s31, 1
      %p252 = por %p250, %p251
      %p253 = scmp.ne.s32.totalorder %s242, %s243
      %p254 = scmp.eq.s32.totalorder %s31, 0
      %p255 = por %p253, %p254
      %p256 = scmp.ne.s32.totalorder %s242, %s243
      %p257 = scmp.eq.s32.totalorder %s32, 1
      %p258 = por %p256, %p257
      %p260 = scmp.ne.s32.totalorder %s243, %s259
      %p261 = scmp.eq.s32.totalorder %s32, 0
      %p262 = por %p260, %p261
      %p263 = scmp.le.s32.totalorder 1, %s26
      %p264 = scmp.lt.s32.totalorder %s26, 3
      %p265 = pnand %p263, %p264
      %p266 = pneg %p265
      // Predicated region
      $region9: #{tpu_custom_call.1} parent=5 // pred_check
        _
      $region10: #{tpu_custom_call.1} parent=5 // pred_check_branch
        %268 = sbr.rel (%p265) target = $region12
      $region11: #{tpu_custom_call.1} parent=5 // pred_region
        %s269 = ssub.s32 %s26, 1
        // Predicated region
        $region13: #{tpu_custom_call.1} parent=11 // pred_check
          %p270 = pneg %p87
        $region14: #{tpu_custom_call.1} parent=11 // pred_check_branch
          %272 = sbr.rel (%p270) target = $region16
        $region15: #{tpu_custom_call.1} parent=11 // pred_region
          %s274 = ssub.s32 1536, 1536
          %275 = vsyncadd [#allocation6], %s274
          %s276 = sshll.u32 [#allocation5], 4
          %s277 = int_to_ptr.vmem [resolvable:$true] %s276
          %282 = dma.hbm_to_vmem [thread:$0]  %s1, 1536, %s277, [#allocation6], 128, 128, 8
        $region16: #{tpu_custom_call.1} parent=11 // pred_fallthru
          _
        // Predicated region
        $region17: #{tpu_custom_call.1} parent=11 // pred_check
          %p283 = pneg %p108
        $region18: #{tpu_custom_call.1} parent=11 // pred_check_branch
          %285 = sbr.rel (%p283) target = $region20
        $region19: #{tpu_custom_call.1} parent=11 // pred_region
          _
        $region20: #{tpu_custom_call.1} parent=11 // pred_fallthru
          _
        // Predicated region
        $region21: #{tpu_custom_call.1} parent=11 // pred_check
          %p286 = pneg %p129
        $region22: #{tpu_custom_call.1} parent=11 // pred_check_branch
          %288 = sbr.rel (%p286) target = $region24
        $region23: #{tpu_custom_call.1} parent=11 // pred_region
          %s290 = ssub.s32 1536, 1536
          %291 = vsyncadd [#allocation6], %s290
          %s292 = sshll.u32 [#allocation7], 4
          %s293 = int_to_ptr.vmem [resolvable:$true] %s292
          %298 = dma.hbm_to_vmem [thread:$0]  %s3, 1536, %s293, [#allocation6], 128, 128, 8
        $region24: #{tpu_custom_call.1} parent=11 // pred_fallthru
          _
        // Predicated region
        $region25: #{tpu_custom_call.1} parent=11 // pred_check
          %p299 = pneg %p150
        $region26: #{tpu_custom_call.1} parent=11 // pred_check_branch
          %301 = sbr.rel (%p299) target = $region28
        $region27: #{tpu_custom_call.1} parent=11 // pred_region
          %s303 = ssub.s32 768, 768
          %304 = vsyncadd [#allocation9], %s303
          %s305 = sshll.u32 [#allocation8], 4
          %s306 = int_to_ptr.vmem [resolvable:$true] %s305
          %311 = dma.hbm_to_vmem [thread:$0]  %s4, 768, %s306, [#allocation9], 64, 64, 4
        $region28: #{tpu_custom_call.1} parent=11 // pred_fallthru
          _
        // Predicated region
        $region29: #{tpu_custom_call.1} parent=11 // pred_check
          %p312 = pneg %p171
        $region30: #{tpu_custom_call.1} parent=11 // pred_check_branch
          %314 = sbr.rel (%p312) target = $region32
        $region31: #{tpu_custom_call.1} parent=11 // pred_region
          _
        $region32: #{tpu_custom_call.1} parent=11 // pred_fallthru
          _
      $region12: #{tpu_custom_call.1} parent=5 // pred_fallthru
        _
      %p315 = scmp.lt.s32.totalorder %s26, 2
      // Predicated region
      $region33: #{tpu_custom_call.1} parent=5 // pred_check
        %p316 = pneg %p315
      $region34: #{tpu_custom_call.1} parent=5 // pred_check_branch
        %318 = sbr.rel (%p316) target = $region36
      $region35: #{tpu_custom_call.1} parent=5 // pred_region
        // Predicated region
        $region37: #{tpu_custom_call.1} parent=35 // pred_check
          %p319 = pneg %p60
        $region38: #{tpu_custom_call.1} parent=35 // pred_check_branch
          %321 = sbr.rel (%p319) target = $region40
        $region39: #{tpu_custom_call.1} parent=35 // pred_region
          %s322 = sand.u32 %s50, 1
          %s323 = scalar_lea.sflag [#allocation3], %s322
          %s324 = sand.u32 %s50, 1
          %s325 = smul.addr %s324, 8
          %s326 = scalar_lea.vmem [#allocation2], %s325
          %s328 = ssub.s32 128, 128
          %329 = vsyncadd %s323, %s328
          %s330 = sadd.s32 %s34, %s33
          %s331 = smul.addr %s330, 128
          %s332 = scalar_lea.hbm %s0, %s331
          %s334 = sshll.u32 %s326, 4
          %s335 = int_to_ptr.vmem [resolvable:$true] %s334
          %337 = dma.hbm_to_vmem [thread:$0]  %s332, 128, %s335, %s323
        $region40: #{tpu_custom_call.1} parent=35 // pred_fallthru
          _
      $region36: #{tpu_custom_call.1} parent=5 // pred_fallthru
        _
      %p338 = scmp.le.s32.totalorder 1, %s26
      %p339 = scmp.lt.s32.totalorder %s26, 3
      %p340 = pnand %p338, %p339
      %p341 = pneg %p340
      // Predicated region
      $region41: #{tpu_custom_call.1} parent=5 // pred_check
        _
      $region42: #{tpu_custom_call.1} parent=5 // pred_check_branch
        %343 = sbr.rel (%p340) target = $region44
      $region43: #{tpu_custom_call.1} parent=5 // pred_region
        %s344 = ssub.s32 %s26, 1
        %s345 = sand.u32 %s53, 1
        %s346 = scalar_lea.sflag [#allocation3], %s345
        %s347 = sand.u32 %s53, 1
        %s348 = smul.addr %s347, 8
        %s349 = scalar_lea.vmem [#allocation2], %s348
        // Predicated region
        $region45: #{tpu_custom_call.1} parent=43 // pred_check
          %p350 = pneg %p66
        $region46: #{tpu_custom_call.1} parent=43 // pred_check_branch
          %352 = sbr.rel (%p350) target = $region48
        $region47: #{tpu_custom_call.1} parent=43 // pred_region
          %353 = dma.done %s346, 128
        $region48: #{tpu_custom_call.1} parent=43 // pred_fallthru
          _
        // Predicated region
        $region49: #{tpu_custom_call.1} parent=43 // pred_check
          %p354 = pneg %p87
        $region50: #{tpu_custom_call.1} parent=43 // pred_check_branch
          %356 = sbr.rel (%p354) target = $region52
        $region51: #{tpu_custom_call.1} parent=43 // pred_region
          %357 = dma.done [#allocation6], 1536
        $region52: #{tpu_custom_call.1} parent=43 // pred_fallthru
          _
        // Predicated region
        $region53: #{tpu_custom_call.1} parent=43 // pred_check
          %p358 = pneg %p129
        $region54: #{tpu_custom_call.1} parent=43 // pred_check_branch
          %360 = sbr.rel (%p358) target = $region56
        $region55: #{tpu_custom_call.1} parent=43 // pred_region
          %361 = dma.done [#allocation6], 1536
        $region56: #{tpu_custom_call.1} parent=43 // pred_fallthru
          _
        // Predicated region
        $region57: #{tpu_custom_call.1} parent=43 // pred_check
          %p362 = pneg %p150
        $region58: #{tpu_custom_call.1} parent=43 // pred_check_branch
          %364 = sbr.rel (%p362) target = $region60
        $region59: #{tpu_custom_call.1} parent=43 // pred_region
          %365 = dma.done [#allocation9], 768
        $region60: #{tpu_custom_call.1} parent=43 // pred_fallthru
          _
        %s366 = sand.u32 %s53, 1
        %s367 = scalar_lea.sflag [#allocation3], %s366
        %s368 = sand.u32 %s53, 1
        %s369 = smul.addr %s368, 8
        %s370 = scalar_lea.vmem [#allocation2], %s369
        %p371 = pneg %p66
        %p372 = pneg %p63
        %p373 = pneg %p87
        %p374 = pneg %p84
        %p375 = pneg %p108
        %p376 = pneg %p105
        %p377 = pneg %p129
        %p378 = pneg %p126
        %p379 = pneg %p150
        %p380 = pneg %p147
        %p381 = pneg %p171
        %p382 = pneg %p168
        %p383 = pneg %p199
        %p384 = pneg %p196
        %s385 = sand.u32 %s186, 1
        %s386 = scalar_lea.sflag [#allocation4], %s385
        %s387 = sand.u32 %s186, 1
        %s388 = smul.addr %s387, 8
        %s389 = scalar_lea.vmem [#allocation10], %s388
        %p390 = pneg %p227
        %p391 = pneg %p224
        %s392 = sand.u32 %s31, 1
        %s393 = scalar_lea.sflag [#allocation12], %s392
        %s394 = sand.u32 %s214, 1
        %s395 = smul.addr %s394, 8
        %s396 = scalar_lea.vmem [#allocation11], %s395
        %p397 = pneg %p255
        %p398 = pneg %p252
        %s399 = sand.u32 %s31, 1
        %s400 = scalar_lea.sflag [#allocation12], %s399
        %s401 = sand.u32 %s242, 1
        %s402 = smul.addr %s401, 4
        %s403 = scalar_lea.vmem [#allocation13], %s402
        %v405 = vld [vmem:[%s349] sm:$0xff]
        %v406 = vpack.c.bf16 %v405, %v405
        %v407 = vld [vmem:[#allocation5] sm:$0xff]
        %v408 = vld [vmem:[#allocation5 + $0x8] sm:$0xff]
        %v409 = vld [vmem:[#allocation5 + $0x10] sm:$0xff]
        %v410 = vld [vmem:[#allocation5 + $0x18] sm:$0xff]
        %v411 = vld [vmem:[#allocation5 + $0x20] sm:$0xff]
        %v412 = vld [vmem:[#allocation5 + $0x28] sm:$0xff]
        %v413 = vld [vmem:[#allocation5 + $0x30] sm:$0xff]
        %v414 = vld [vmem:[#allocation5 + $0x38] sm:$0xff]
        %v415 = vld [vmem:[#allocation5 + $0x40] sm:$0xff]
        %v416 = vld [vmem:[#allocation5 + $0x48] sm:$0xff]
        %v417 = vld [vmem:[#allocation5 + $0x50] sm:$0xff]
        %v418 = vld [vmem:[#allocation5 + $0x58] sm:$0xff]
        %v419 = vld [vmem:[%s2] sm:$0x3]
        %v421 = vlaneseq
        %v422 = vshrl.u32 %v421, 7
        %v423 = vsub.s32 0, %v422
        %v424 = vrot.slane %v419, %v423
        %v425 = vlaneseq
        %v426 = vshrl.u32 %v425, 7
        %v427 = vsub.s32 1, %v426
        %v428 = vrot.slane %v419, %v427
        %v443 = vunpack.c.l.b16 %v407
        %v444 = vunpack.c.h.b16 %v407
        %v445 = vunpack.c.l.b16 %v408
        %v446 = vunpack.c.h.b16 %v408
        %v447 = vunpack.c.l.b16 %v409
        %v448 = vunpack.c.h.b16 %v409
        %v449 = vunpack.c.l.b16 %v410
        %v450 = vunpack.c.h.b16 %v410
        %v451 = vunpack.c.l.b16 %v411
        %v452 = vunpack.c.h.b16 %v411
        %v453 = vunpack.c.l.b16 %v412
        %v454 = vunpack.c.h.b16 %v412
        %v455 = vunpack.c.l.b16 %v413
        %v456 = vunpack.c.h.b16 %v413
        %v457 = vunpack.c.l.b16 %v414
        %v458 = vunpack.c.h.b16 %v414
        %v459 = vunpack.c.l.b16 %v415
        %v460 = vunpack.c.h.b16 %v415
        %v461 = vunpack.c.l.b16 %v416
        %v462 = vunpack.c.h.b16 %v416
        %v463 = vunpack.c.l.b16 %v417
        %v464 = vunpack.c.h.b16 %v417
        %v465 = vunpack.c.l.b16 %v418
        %v466 = vunpack.c.h.b16 %v418
        %v467 = vpack.c.b16 %v445, %v443
        %v468 = vpack.c.b16 %v446, %v444
        %v469 = vpack.c.b16 %v449, %v447
        %v470 = vpack.c.b16 %v450, %v448
        %v471 = vpack.c.b16 %v453, %v451
        %v472 = vpack.c.b16 %v454, %v452
        %v473 = vpack.c.b16 %v457, %v455
        %v474 = vpack.c.b16 %v458, %v456
        %v475 = vpack.c.b16 %v461, %v459
        %v476 = vpack.c.b16 %v462, %v460
        %v477 = vpack.c.b16 %v465, %v463
        %v478 = vpack.c.b16 %v466, %v464
        %vm491 = vcmask 785408
        %v493 = vsel %vm491, %v406, 0
        %495 = vmatprep.subr.bf16.mxu0 %v468
        %496 = vmatpush1.bf16.msra.mxu0 %v467
        %497 = vmatprep.subr.bf16.mxu0 %v470
        %498 = vmatpush1.bf16.msra.mxu0 %v469
        %499 = vmatprep.subr.bf16.mxu0 %v472
        %500 = vmatpush1.bf16.msra.mxu0 %v471
        %501 = vmatprep.subr.bf16.mxu0 %v474
        %502 = vmatpush1.bf16.msra.mxu0 %v473
        %503 = vmatprep.subr.bf16.mxu0 %v476
        %504 = vmatpush1.bf16.msra.mxu0 %v475
        %505 = vmatprep.subr.bf16.mxu0 %v478
        %506 = vmatpush1.bf16.msra.mxu0 %v477
        %507 = vmatprep.subr.bf16.mxu0 0
        %508 = vmatpush1.bf16.msra.mxu0 0
        %509 = vmatprep.subr.bf16.mxu0 0
        %510 = vmatpush1.bf16.msra.mxu0 0
        %511 = vmatprep.subr.bf16.mxu0 0
        %512 = vmatpush1.bf16.msra.mxu0 0
        %513 = vmatprep.subr.bf16.mxu0 0
        %514 = vmatpush1.bf16.msra.mxu0 0
        %515 = vmatprep.subr.bf16.mxu0 0
        %516 = vmatpush1.bf16.msra.mxu0 0
        %517 = vmatprep.subr.bf16.mxu0 0
        %518 = vmatpush1.bf16.msra.mxu0 0
        %519 = vmatprep.subr.bf16.mxu0 0
        %520 = vmatpush1.bf16.msra.mxu0 0
        %521 = vmatprep.subr.bf16.mxu0 0
        %522 = vmatpush1.bf16.msra.mxu0 0
        %523 = vmatprep.subr.bf16.mxu0 0
        %524 = vmatpush1.bf16.msra.mxu0 0
        %525 = vmatprep.subr.bf16.mxu0 0
        %526 = vmatpush1.bf16.msra.mxu0 0
        %527 = vmatprep.mubr.bf16.mxu0 0
        %528 = vmatmul.mubr.bf16.gmra.mrb[0].mxu0 %v493
        %v529 = vpop.f32.mrb[0].mxu0
        %v530 = vadd.f32 %v424, %v529
        %v531 = vpop.f32.mrb[0].mxu0
        %v532 = vadd.f32 %v428, %v531
        %v533 = vpop.f32.mrb[0].mxu0
        %v534 = vpop.f32.mrb[0].mxu0
        %535 = vdwg.mxu0
        %v536 = vld [vmem:[#allocation7] sm:$0xff]
        %v537 = vld [vmem:[#allocation7 + $0x8] sm:$0xff]
        %v538 = vld [vmem:[#allocation7 + $0x10] sm:$0xff]
        %v539 = vld [vmem:[#allocation7 + $0x18] sm:$0xff]
        %v540 = vld [vmem:[#allocation7 + $0x20] sm:$0xff]
        %v541 = vld [vmem:[#allocation7 + $0x28] sm:$0xff]
        %v542 = vld [vmem:[#allocation7 + $0x30] sm:$0xff]
        %v543 = vld [vmem:[#allocation7 + $0x38] sm:$0xff]
        %v544 = vld [vmem:[#allocation7 + $0x40] sm:$0xff]
        %v545 = vld [vmem:[#allocation7 + $0x48] sm:$0xff]
        %v546 = vld [vmem:[#allocation7 + $0x50] sm:$0xff]
        %v547 = vld [vmem:[#allocation7 + $0x58] sm:$0xff]
        %v560 = vunpack.c.l.b16 %v536
        %v561 = vunpack.c.h.b16 %v536
        %v562 = vunpack.c.l.b16 %v537
        %v563 = vunpack.c.h.b16 %v537
        %v564 = vunpack.c.l.b16 %v538
        %v565 = vunpack.c.h.b16 %v538
        %v566 = vunpack.c.l.b16 %v539
        %v567 = vunpack.c.h.b16 %v539
        %v568 = vunpack.c.l.b16 %v540
        %v569 = vunpack.c.h.b16 %v540
        %v570 = vunpack.c.l.b16 %v541
        %v571 = vunpack.c.h.b16 %v541
        %v572 = vunpack.c.l.b16 %v542
        %v573 = vunpack.c.h.b16 %v542
        %v574 = vunpack.c.l.b16 %v543
        %v575 = vunpack.c.h.b16 %v543
        %v576 = vunpack.c.l.b16 %v544
        %v577 = vunpack.c.h.b16 %v544
        %v578 = vunpack.c.l.b16 %v545
        %v579 = vunpack.c.h.b16 %v545
        %v580 = vunpack.c.l.b16 %v546
        %v581 = vunpack.c.h.b16 %v546
        %v582 = vunpack.c.l.b16 %v547
        %v583 = vunpack.c.h.b16 %v547
        %v584 = vpack.c.b16 %v562, %v560
        %v585 = vpack.c.b16 %v563, %v561
        %v586 = vpack.c.b16 %v566, %v564
        %v587 = vpack.c.b16 %v567, %v565
        %v588 = vpack.c.b16 %v570, %v568
        %v589 = vpack.c.b16 %v571, %v569
        %v590 = vpack.c.b16 %v574, %v572
        %v591 = vpack.c.b16 %v575, %v573
        %v592 = vpack.c.b16 %v578, %v576
        %v593 = vpack.c.b16 %v579, %v577
        %v594 = vpack.c.b16 %v582, %v580
        %v595 = vpack.c.b16 %v583, %v581
        %608 = vmatprep.subr.bf16.mxu0 %v585
        %609 = vmatpush1.bf16.msra.mxu0 %v584
        %610 = vmatprep.subr.bf16.mxu0 %v587
        %611 = vmatpush1.bf16.msra.mxu0 %v586
        %612 = vmatprep.subr.bf16.mxu0 %v589
        %613 = vmatpush1.bf16.msra.mxu0 %v588
        %614 = vmatprep.subr.bf16.mxu0 %v591
        %615 = vmatpush1.bf16.msra.mxu0 %v590
        %616 = vmatprep.subr.bf16.mxu0 %v593
        %617 = vmatpush1.bf16.msra.mxu0 %v592
        %618 = vmatprep.subr.bf16.mxu0 %v595
        %619 = vmatpush1.bf16.msra.mxu0 %v594
        %620 = vmatprep.subr.bf16.mxu0 0
        %621 = vmatpush1.bf16.msra.mxu0 0
        %622 = vmatprep.subr.bf16.mxu0 0
        %623 = vmatpush1.bf16.msra.mxu0 0
        %624 = vmatprep.subr.bf16.mxu0 0
        %625 = vmatpush1.bf16.msra.mxu0 0
        %626 = vmatprep.subr.bf16.mxu0 0
        %627 = vmatpush1.bf16.msra.mxu0 0
        %628 = vmatprep.subr.bf16.mxu0 0
        %629 = vmatpush1.bf16.msra.mxu0 0
        %630 = vmatprep.subr.bf16.mxu0 0
        %631 = vmatpush1.bf16.msra.mxu0 0
        %632 = vmatprep.subr.bf16.mxu0 0
        %633 = vmatpush1.bf16.msra.mxu0 0
        %634 = vmatprep.subr.bf16.mxu0 0
        %635 = vmatpush1.bf16.msra.mxu0 0
        %636 = vmatprep.subr.bf16.mxu0 0
        %637 = vmatpush1.bf16.msra.mxu0 0
        %638 = vmatprep.subr.bf16.mxu0 0
        %639 = vmatpush1.bf16.msra.mxu0 0
        %640 = vmatprep.mubr.bf16.mxu0 0
        %641 = vmatmul.mubr.bf16.gmra.mrb[0].mxu0 %v493
        %v642 = vpop.f32.mrb[0].mxu0
        %v643 = vadd.f32 0.0, %v642
        %v644 = vpop.f32.mrb[0].mxu0
        %v645 = vadd.f32 0.0, %v644
        %v646 = vpop.f32.mrb[0].mxu0
        %v647 = vpop.f32.mrb[0].mxu0
        %648 = vdwg.mxu0
        %v649 = vld [vmem:[#allocation8] sm:$0xf]
        %v650 = vld [vmem:[#allocation8 + $0x4] sm:$0xf]
        %v651 = vld [vmem:[#allocation8 + $0x8] sm:$0xf]
        %v652 = vld [vmem:[#allocation8 + $0xc] sm:$0xf]
        %v653 = vld [vmem:[#allocation8 + $0x10] sm:$0xf]
        %v654 = vld [vmem:[#allocation8 + $0x14] sm:$0xf]
        %v655 = vld [vmem:[#allocation8 + $0x18] sm:$0xf]
        %v656 = vld [vmem:[#allocation8 + $0x1c] sm:$0xf]
        %v657 = vld [vmem:[#allocation8 + $0x20] sm:$0xf]
        %v658 = vld [vmem:[#allocation8 + $0x24] sm:$0xf]
        %v659 = vld [vmem:[#allocation8 + $0x28] sm:$0xf]
        %v660 = vld [vmem:[#allocation8 + $0x2c] sm:$0xf]
        %v661 = vld [vmem:[%s5] sm:$0x1]
        %v663 = vlaneseq
        %v664 = vshrl.u32 %v663, 7
        %v665 = vsub.s32 0, %v664
        %v666 = vrot.slane %v661, %v665
        %v680 = vunpack.c.l.b16 %v649
        %v681 = vunpack.c.l.b16 %v650
        %v682 = vunpack.c.l.b16 %v651
        %v683 = vunpack.c.l.b16 %v652
        %v684 = vunpack.c.l.b16 %v653
        %v685 = vunpack.c.l.b16 %v654
        %v686 = vunpack.c.l.b16 %v655
        %v687 = vunpack.c.l.b16 %v656
        %v688 = vunpack.c.l.b16 %v657
        %v689 = vunpack.c.l.b16 %v658
        %v690 = vunpack.c.l.b16 %v659
        %v691 = vunpack.c.l.b16 %v660
        %v692 = vpack.c.b16 %v681, %v680
        %v693 = vpack.c.b16 %v683, %v682
        %v694 = vpack.c.b16 %v685, %v684
        %v695 = vpack.c.b16 %v687, %v686
        %v696 = vpack.c.b16 %v689, %v688
        %v697 = vpack.c.b16 %v691, %v690
        %704 = vmatprep.subr.bf16.mxu0 0
        %705 = vmatpush1.bf16.msra.mxu0 %v692
        %706 = vmatprep.subr.bf16.mxu0 0
        %707 = vmatpush1.bf16.msra.mxu0 %v693
        %708 = vmatprep.subr.bf16.mxu0 0
        %709 = vmatpush1.bf16.msra.mxu0 %v694
        %710 = vmatprep.subr.bf16.mxu0 0
        %711 = vmatpush1.bf16.msra.mxu0 %v695
        %712 = vmatprep.subr.bf16.mxu0 0
        %713 = vmatpush1.bf16.msra.mxu0 %v696
        %714 = vmatprep.subr.bf16.mxu0 0
        %715 = vmatpush1.bf16.msra.mxu0 %v697
        %716 = vmatprep.subr.bf16.mxu0 0
        %717 = vmatpush1.bf16.msra.mxu0 0
        %718 = vmatprep.subr.bf16.mxu0 0
        %719 = vmatpush1.bf16.msra.mxu0 0
        %720 = vmatprep.subr.bf16.mxu0 0
        %721 = vmatpush1.bf16.msra.mxu0 0
        %722 = vmatprep.subr.bf16.mxu0 0
        %723 = vmatpush1.bf16.msra.mxu0 0
        %724 = vmatprep.subr.bf16.mxu0 0
        %725 = vmatpush1.bf16.msra.mxu0 0
        %726 = vmatprep.subr.bf16.mxu0 0
        %727 = vmatpush1.bf16.msra.mxu0 0
        %728 = vmatprep.subr.bf16.mxu0 0
        %729 = vmatpush1.bf16.msra.mxu0 0
        %730 = vmatprep.subr.bf16.mxu0 0
        %731 = vmatpush1.bf16.msra.mxu0 0
        %732 = vmatprep.subr.bf16.mxu0 0
        %733 = vmatpush1.bf16.msra.mxu0 0
        %734 = vmatprep.subr.bf16.mxu0 0
        %735 = vmatpush1.bf16.msra.mxu0 0
        %736 = vmatprep.mubr.bf16.mxu0 0
        %737 = vmatmul.mubr.bf16.gmra.mrb[0].mxu0 %v493
        %v738 = vpop.f32.mrb[0].mxu0
        %v739 = vadd.f32 %v666, %v738
        %v740 = vpop.f32.mrb[0].mxu0
        %v741 = vpop.f32.mrb[0].mxu0
        %v742 = vpop.f32.mrb[0].mxu0
        %743 = vdwg.mxu0
        %v744 = vpack.c.bf16 %v530, %v530
        %v745 = vpack.c.bf16 %v532, %v532
        %v748 = vunpack.c.l.b16 %v744
        %v749 = vunpack.c.l.b16 %v745
        %v750 = vpack.c.b16 %v749, %v748
        %vm752 = vcmask 1043456
        %vm753 = vcmask 523268
        %vm754 = vmor %vm753, %vm752
        %755 = vst.msk [vmem:[%s389] sm:$0xff] %vm754, %v750
        %v756 = vpack.c.bf16 %v643, %v643
        %v757 = vpack.c.bf16 %v645, %v645
        %v760 = vunpack.c.l.b16 %v756
        %v761 = vunpack.c.l.b16 %v757
        %v762 = vpack.c.b16 %v761, %v760
        %764 = vst.msk [vmem:[%s396] sm:$0xff] %vm754, %v762
        %v765 = vpack.c.bf16 %v739, %v739
        %vm766 = vcmask 781312
        %767 = vst.msk [vmem:[%s403] sm:$0xf] %vm766, %v765
        %s768 = sand.u32 %s186, 1
        %s769 = scalar_lea.sflag [#allocation4], %s768
        %s770 = sand.u32 %s186, 1
        %s771 = smul.addr %s770, 8
        %s772 = scalar_lea.vmem [#allocation10], %s771
        %s773 = sand.u32 %s31, 1
        %s774 = scalar_lea.sflag [#allocation12], %s773
        %s775 = sand.u32 %s214, 1
        %s776 = smul.addr %s775, 8
        %s777 = scalar_lea.vmem [#allocation11], %s776
        %s778 = sand.u32 %s31, 1
        %s779 = scalar_lea.sflag [#allocation12], %s778
        %s780 = sand.u32 %s242, 1
        %s781 = smul.addr %s780, 4
        %s782 = scalar_lea.vmem [#allocation13], %s781
        // Predicated region
        $region61: #{tpu_custom_call.1} parent=43 // pred_check
          %p783 = pneg %p196
        $region62: #{tpu_custom_call.1} parent=43 // pred_check_branch
          %785 = sbr.rel (%p783) target = $region64
        $region63: #{tpu_custom_call.1} parent=43 // pred_region
          %s787 = ssub.s32 128, 128
          %788 = vsyncadd %s769, %s787
          %s789 = smul.addr %s36, 2
          %s790 = smul.addr %s35, 2
          %s791 = sadd.s32 %s789, %s790
          %s792 = smul.addr %s791, 64
          %s793 = scalar_lea.hbm %s6, %s792
          %s795 = sshll.u32 %s772, 4
          %s796 = int_to_ptr.vmem [resolvable:$true] %s795
          %798 = dma.vmem_to_hbm [thread:$0]  %s796, 128, %s793, %s769
        $region64: #{tpu_custom_call.1} parent=43 // pred_fallthru
          _
        // Predicated region
        $region65: #{tpu_custom_call.1} parent=43 // pred_check
          %p799 = pneg %p224
        $region66: #{tpu_custom_call.1} parent=43 // pred_check_branch
          %801 = sbr.rel (%p799) target = $region68
        $region67: #{tpu_custom_call.1} parent=43 // pred_region
          %s803 = ssub.s32 128, 128
          %804 = vsyncadd %s774, %s803
          %s805 = smul.addr %s36, 2
          %s806 = smul.addr %s35, 2
          %s807 = sadd.s32 %s805, %s806
          %s808 = smul.addr %s807, 64
          %s809 = scalar_lea.hbm %s7, %s808
          %s811 = sshll.u32 %s777, 4
          %s812 = int_to_ptr.vmem [resolvable:$true] %s811
          %814 = dma.vmem_to_hbm [thread:$0]  %s812, 128, %s809, %s774
        $region68: #{tpu_custom_call.1} parent=43 // pred_fallthru
          _
        // Predicated region
        $region69: #{tpu_custom_call.1} parent=43 // pred_check
          %p815 = pneg %p252
        $region70: #{tpu_custom_call.1} parent=43 // pred_check_branch
          %817 = sbr.rel (%p815) target = $region72
        $region71: #{tpu_custom_call.1} parent=43 // pred_region
          %s819 = ssub.s32 64, 64
          %820 = vsyncadd %s779, %s819
          %s821 = sadd.s32 %s36, %s35
          %s822 = smul.addr %s821, 64
          %s823 = scalar_lea.hbm %s8, %s822
          %s825 = sshll.u32 %s782, 4
          %s826 = int_to_ptr.vmem [resolvable:$true] %s825
          %828 = dma.vmem_to_hbm [thread:$0]  %s826, 64, %s823, %s779
        $region72: #{tpu_custom_call.1} parent=43 // pred_fallthru
          _
      $region44: #{tpu_custom_call.1} parent=5 // pred_fallthru
        _
      %p829 = scmp.le.s32.totalorder 2, %s26
      // Predicated region
      $region73: #{tpu_custom_call.1} parent=5 // pred_check
        %p830 = pneg %p829
      $region74: #{tpu_custom_call.1} parent=5 // pred_check_branch
        %832 = sbr.rel (%p830) target = $region76
      $region75: #{tpu_custom_call.1} parent=5 // pred_region
        %s833 = ssub.s32 %s26, 2
        // Predicated region
        $region77: #{tpu_custom_call.1} parent=75 // pred_check
          %p834 = pneg %p202
        $region78: #{tpu_custom_call.1} parent=75 // pred_check_branch
          %836 = sbr.rel (%p834) target = $region80
        $region79: #{tpu_custom_call.1} parent=75 // pred_region
          %s837 = sand.u32 %s187, 1
          %s838 = scalar_lea.sflag [#allocation4], %s837
          %s839 = sand.u32 %s187, 1
          %s840 = smul.addr %s839, 8
          %s841 = scalar_lea.vmem [#allocation10], %s840
          %842 = dma.done %s838, 128
        $region80: #{tpu_custom_call.1} parent=75 // pred_fallthru
          _
        // Predicated region
        $region81: #{tpu_custom_call.1} parent=75 // pred_check
          %p843 = pneg %p230
        $region82: #{tpu_custom_call.1} parent=75 // pred_check_branch
          %845 = sbr.rel (%p843) target = $region84
        $region83: #{tpu_custom_call.1} parent=75 // pred_region
          %s846 = sand.u32 %s32, 1
          %s847 = scalar_lea.sflag [#allocation12], %s846
          %s848 = sand.u32 %s215, 1
          %s849 = smul.addr %s848, 8
          %s850 = scalar_lea.vmem [#allocation11], %s849
          %851 = dma.done %s847, 128
        $region84: #{tpu_custom_call.1} parent=75 // pred_fallthru
          _
        // Predicated region
        $region85: #{tpu_custom_call.1} parent=75 // pred_check
          %p852 = pneg %p258
        $region86: #{tpu_custom_call.1} parent=75 // pred_check_branch
          %854 = sbr.rel (%p852) target = $region88
        $region87: #{tpu_custom_call.1} parent=75 // pred_region
          %s855 = sand.u32 %s32, 1
          %s856 = scalar_lea.sflag [#allocation12], %s855
          %s857 = sand.u32 %s243, 1
          %s858 = smul.addr %s857, 4
          %s859 = scalar_lea.vmem [#allocation13], %s858
          %860 = dma.done %s856, 64
        $region88: #{tpu_custom_call.1} parent=75 // pred_fallthru
          _
      $region76: #{tpu_custom_call.1} parent=5 // pred_fallthru
        _
    $region6: #{tpu_custom_call.1} parent=1 // loop_footer
      %s30 = sadd.s32 1, %s26
    $region7: #{tpu_custom_call.1} parent=1 // loop_footer_branch
      %25 = sbr.rel target = $region3
    $region8: #{tpu_custom_call.1} parent=1 // loop_exit
      _
    %861 = vsyncpa [#allocation3], 1
    %s862 = scalar_lea.sflag [#allocation3], 1
    %863 = vsyncpa %s862, 1
    %864 = vsyncpa [#allocation6], 1
    %865 = vsyncpa [#allocation9], 1
    %866 = vsyncpa [#allocation4], 1
    %s867 = scalar_lea.sflag [#allocation4], 1
    %868 = vsyncpa %s867, 1
    %869 = vsyncpa [#allocation12], 1
    %s870 = scalar_lea.sflag [#allocation12], 1
    %871 = vsyncpa %s870, 1

</llo_original>
